<compile_context>
chip_gen: v6e
topology: v6e:2x2x1
jax: 0.10.0
libtpu: 0.0.40
codegen_flags: <defaults>
</compile_context>

<pallas_src>
import jax
import jax.numpy as jnp
from jax import lax
from jax.experimental import pallas as pl
from jax.experimental.pallas import tpu as pltpu

LANE = 128
SUBLANE = 8
CHUNK_ROWS = 512  # rows per inner accumulate chunk: 512 x 128 f32 = 256 KiB


def _vmem_budget():
    """(pipeline_budget_bytes, vmem_limit_bytes), tuned per TPU generation."""
    vmem_cap = 64 << 20  # conservative default: v7x has 64 MiB VMEM per TC
    try:
        info = pltpu.get_tpu_info()
        vmem_cap = int(getattr(info, "vmem_capacity_bytes", vmem_cap))
    except Exception:
        pass
    if vmem_cap >= (96 << 20):        # v5e / v6e class (128 MiB VMEM)
        return 32 << 20, 80 << 20
    return 16 << 20, 40 << 20         # v7x class (64 MiB VMEM per TC)


def _make_mse_sum_kernel(rows, row_block, chunk, uniform):
    """Sum-of-squared-differences over a [rows, LANE] slab.

    Grid = (num_cores, steps_per_core). Each core owns a contiguous range of
    row blocks and accumulates into its own resident (1, 8, 128) output block
    (output block index depends only on the parallel core axis). Full blocks
    run an unmasked chunked accumulate; only trailing partial / out-of-range
    blocks take the masked branch.
    """
    nchunks = row_block // chunk

    def kernel(x_ref, t_ref, out_ref):
        i = pl.program_id(1)
        steps_per_core = pl.num_programs(1)

        @pl.when(i == 0)
        def _():
            out_ref[...] = jnp.zeros_like(out_ref)

        def accum(valid_rows):
            # valid_rows is None on the unmasked fast path, else a scalar.
            def body(k, carry):
                start = pl.multiple_of(k * chunk, chunk)
                xv = x_ref[pl.ds(start, chunk), :].astype(jnp.float32)
                tv = t_ref[pl.ds(start, chunk), :].astype(jnp.float32)
                d = xv - tv
                sq = d * d
                if valid_rows is not None:
                    ridx = start + lax.broadcasted_iota(
                        jnp.int32, (chunk, LANE), 0)
                    sq = jnp.where(ridx < valid_rows, sq, 0.0)
                # Fold to one (8,128) vreg of partials: reshape keeps (8,128)
                # tiles intact, so the axis-0 sum is plain VPU adds.
                out_ref[0, :, :] += sq.reshape(
                    chunk // SUBLANE, SUBLANE, LANE).sum(axis=0)
                return carry

            lax.fori_loop(0, nchunks, body, 0)

        if uniform:
            accum(None)  # every block is full and in range: no masks anywhere
        else:
            c = pl.program_id(0)
            block_start = (c * steps_per_core + i) * row_block
            is_full = block_start + row_block <= rows

            @pl.when(is_full)
            def _():
                accum(None)

            @pl.when(jnp.logical_not(is_full))
            def _():
                # <= 0 for clamped out-of-range logical blocks -> contributes 0
                accum(rows - block_start)

    return kernel


def content_loss_layer(x, target_content):
    """Pallas equivalent of ContentLoss_Layer.forward.

    Returns (x, loss) with loss = mse_loss(x, target_content); x is passed
    through unchanged (identity, no kernel needed for it).
    # TODO(synk): nn.Module stores the loss on self.loss; returned instead.
    """
    assert x.shape == target_content.shape, "x / target shape mismatch"
    n = x.size
    itemsize = jnp.dtype(x.dtype).itemsize

    xf = x.reshape(-1)
    tf = target_content.reshape(-1)

    # Main slab = largest multiple of 8*128 elements (rows is a multiple of 8);
    # the <1024-element ragged tail is summed in plain JAX -- no jnp.pad, so no
    # padded full-array HBM copies.
    n_main = (n // (SUBLANE * LANE)) * (SUBLANE * LANE)
    rows = n_main // LANE
    if n_main < n:
        tail_sq = jnp.sum(
            (xf[n_main:].astype(jnp.float32)
             - tf[n_main:].astype(jnp.float32)) ** 2)
    else:
        tail_sq = jnp.zeros((), jnp.float32)

    if rows == 0:  # entire input fits in the tail
        return x, tail_sq / jnp.float32(n)

    xs = (xf if n_main == n else xf[:n_main]).reshape(rows, LANE)
    ts = (tf if n_main == n else tf[:n_main]).reshape(rows, LANE)

    pipeline_budget, vmem_limit = _vmem_budget()
    max_row_block = max(
        CHUNK_ROWS,
        (pipeline_budget // (4 * LANE * itemsize)) // CHUNK_ROWS * CHUNK_ROWS)

    if rows <= CHUNK_ROWS:
        chunk = rows                       # multiple of 8 by construction
        row_block = rows
    else:
        chunk = CHUNK_ROWS
        row_block = min(max_row_block, (rows // chunk) * chunk)

    nblocks = pl.cdiv(rows, row_block)
    # Leading "parallel" axis shards the row range over both TensorCores on
    # dual-TC chips (v7x / megacore); it executes sequentially (and correctly)
    # on single-TC v5e / v6e.
    num_cores = 2 if nblocks >= 2 else 1
    steps_per_core = pl.cdiv(nblocks, num_cores)
    uniform = (num_cores * steps_per_core * row_block == rows)

    if num_cores * steps_per_core == nblocks:
        row_map = lambda c, i: (c * steps_per_core + i, 0)
    else:  # clamp logical blocks past the end onto the last real block
        row_map = lambda c, i: (
            jnp.minimum(c * steps_per_core + i, nblocks - 1), 0)

    cost = pl.CostEstimate(
        flops=3 * n, transcendentals=0,
        bytes_accessed=2 * n_main * itemsize + num_cores * SUBLANE * LANE * 4)

    partials = pl.pallas_call(
        _make_mse_sum_kernel(rows, row_block, chunk, uniform),
        out_shape=jax.ShapeDtypeStruct((num_cores, SUBLANE, LANE), jnp.float32),
        grid_spec=pltpu.PrefetchScalarGridSpec(
            num_scalar_prefetch=0,
            grid=(num_cores, steps_per_core),
            in_specs=[
                pl.BlockSpec((row_block, LANE), row_map),
                pl.BlockSpec((row_block, LANE), row_map),
            ],
            out_specs=pl.BlockSpec((1, SUBLANE, LANE), lambda c, i: (c, 0, 0)),
        ),
        compiler_params=pltpu.CompilerParams(
            dimension_semantics=("parallel", "arbitrary"),
            vmem_limit_bytes=vmem_limit,
        ),
        cost_estimate=cost,
    )(xs, ts)

    loss = (jnp.sum(partials) + tail_sq) / jnp.float32(n)
    # TODO(synk): for tiny feature maps the pallas_call dispatch dominates;
    # batch several content/style loss slabs into one call at the call site.
    return x, loss


if __name__ == "__main__":
    root = jax.random.PRNGKey(0)

    cases = [
        (2, 4, 16, 16),     # module-sized: single tiny block, uniform fast path
        (3, 5, 7, 11),      # ragged: plain-JAX tail + 8-row slab
        (2, 8, 128, 130),   # 2 row blocks across 2 cores, partial last block
        (4, 33, 128, 128),  # multi-block per core + partial / clamped OOB block
    ]
    for idx, shape in enumerate(cases):
        kx, kt = jax.random.split(jax.random.fold_in(root, idx))
        x = jax.random.normal(kx, shape, dtype=jnp.float32)
        # target_content fixed deterministically at __init__ time (synthetic).
        target_content = jax.random.normal(kt, shape, dtype=jnp.float32)

        out, loss = content_loss_layer(x, target_content)
        jax.block_until_ready((out, loss))

        ref_loss = jnp.mean((x - target_content) ** 2)
        assert jnp.allclose(loss, ref_loss, rtol=1e-4, atol=1e-6), (
            shape, float(loss), float(ref_loss))
        assert jnp.array_equal(out, x)

    print("KERNEL_OK")
</pallas_src>

<mosaic_0001>
module attributes {stable_mosaic.version = 11 : i64} {
  func.func @kernel(%arg0: i32, %arg1: i32, %arg2: memref<16x128xf32, #tpu.memory_space<vmem>>, %arg3: memref<16x128xf32, #tpu.memory_space<vmem>>, %arg4: memref<1x8x128xf32, #tpu.memory_space<vmem>>) attributes {dimension_semantics = [#tpu.dimension_semantics<parallel>, #tpu.dimension_semantics<arbitrary>], iteration_bounds = array<i64: 1, 1>, scalar_prefetch = 0 : i64, scratch_operands = 0 : i64, tpu.core_type = #tpu.core_type<tc>, window_params = [{transform_indices = @transform_0, window_bounds = array<i64: 16, 128>}, {transform_indices = @transform_1, window_bounds = array<i64: 16, 128>}, {transform_indices = @transform_2, window_bounds = array<i64: 1, 8, 128>}]} {
    %c0_i32 = arith.constant 0 : i32
    %0 = arith.cmpi eq, %arg1, %c0_i32 : i32
    %1 = arith.extui %0 : i1 to i32
    %c0_i32_0 = arith.constant 0 : i32
    %2 = arith.cmpi ne, %1, %c0_i32_0 : i32
    scf.if %2 {
      %cst_9 = arith.constant 0.000000e+00 : f32
      %19 = vector.broadcast %cst_9 : f32 to vector<1x8x128xf32>
      %c0_10 = arith.constant 0 : index
      %c0_11 = arith.constant 0 : index
      %c0_12 = arith.constant 0 : index
      %20 = vector.load %arg4[%c0_10, %c0_11, %c0_12] : memref<1x8x128xf32, #tpu.memory_space<vmem>>, vector<1x8x128xf32>
      tpu.vector_store %arg4[%c0_10, %c0_11, %c0_12], %19 {strides = array<i32>} : memref<1x8x128xf32, #tpu.memory_space<vmem>>, vector<1x8x128xf32>,
    } else {
    }
    %c0_i32_1 = arith.constant 0 : i32
    %c16_i32 = arith.constant 16 : i32
    %3 = arith.muli %c0_i32_1, %c16_i32 : i32
    %4 = tpu.assume_multiple %3, 16 : i32
    %5 = arith.index_cast %4 : i32 to index
    %c0 = arith.constant 0 : index
    %6 = vector.load %arg2[%5, %c0] : memref<16x128xf32, #tpu.memory_space<vmem>>, vector<16x128xf32>
    %7 = arith.index_cast %4 : i32 to index
    %c0_2 = arith.constant 0 : index
    %8 = vector.load %arg3[%7, %c0_2] : memref<16x128xf32, #tpu.memory_space<vmem>>, vector<16x128xf32>
    %9 = arith.subf %6, %8 : vector<16x128xf32>
    %10 = arith.mulf %9, %9 : vector<16x128xf32>
    %c0_3 = arith.constant 0 : index
    %c0_4 = arith.constant 0 : index
    %c0_5 = arith.constant 0 : index
    %11 = vector.load %arg4[%c0_3, %c0_4, %c0_5] : memref<1x8x128xf32, #tpu.memory_space<vmem>>, vector<1x8x128xf32>
    %12 = vector.shape_cast %11 : vector<1x8x128xf32> to vector<8x128xf32>
    %13 = vector.shape_cast %10 : vector<16x128xf32> to vector<2x8x128xf32>
    %cst = arith.constant dense<0.000000e+00> : vector<8x128xf32>
    %14 = vector.multi_reduction <add>, %13, %cst [0] : vector<2x8x128xf32> to vector<8x128xf32>
    %15 = arith.addf %12, %14 : vector<8x128xf32>
    %c0_6 = arith.constant 0 : index
    %c0_7 = arith.constant 0 : index
    %c0_8 = arith.constant 0 : index
    %16 = vector.load %arg4[%c0_6, %c0_7, %c0_8] : memref<1x8x128xf32, #tpu.memory_space<vmem>>, vector<1x8x128xf32>
    %17 = vector.shape_cast %16 : vector<1x8x128xf32> to vector<8x128xf32>
    %18 = vector.shape_cast %15 : vector<8x128xf32> to vector<1x8x128xf32>
    tpu.vector_store %arg4[%c0_6, %c0_7, %c0_8], %18 {strides = array<i32>} : memref<1x8x128xf32, #tpu.memory_space<vmem>>, vector<1x8x128xf32>,
    %c1_i32 = arith.constant 1 : i32
    return
  }
  func.func @transform_0(%arg0: i32, %arg1: i32) -> (i32, i32) {
    %c1_i32 = arith.constant 1 : i32
    %0 = arith.muli %arg0, %c1_i32 : i32
    %1 = arith.addi %0, %arg1 : i32
    %c0_i32 = arith.constant 0 : i32
    %c0_i32_0 = arith.constant 0 : i32
    return %1, %c0_i32 : i32, i32
  }
  func.func @transform_1(%arg0: i32, %arg1: i32) -> (i32, i32) {
    %c1_i32 = arith.constant 1 : i32
    %0 = arith.muli %arg0, %c1_i32 : i32
    %1 = arith.addi %0, %arg1 : i32
    %c0_i32 = arith.constant 0 : i32
    %c0_i32_0 = arith.constant 0 : i32
    return %1, %c0_i32 : i32, i32
  }
  func.func @transform_2(%arg0: i32, %arg1: i32) -> (i32, i32, i32) {
    %c0_i32 = arith.constant 0 : i32
    %c0_i32_0 = arith.constant 0 : i32
    %c0_i32_1 = arith.constant 0 : i32
    return %arg0, %c0_i32, %c0_i32_0 : i32, i32, i32
  }
}

</mosaic_0001>

<llo_original>
// kernel: tpu_custom_call.1
$region0: #{tpu_custom_call.1}
  #allocation0 [shape = 'u32[]', space=smem, size = 0x4, offset = 0x4, fixed_abs, tag = 'smem constant byte address 0x4 - core index']
  #allocation1 [shape = 'u32[144,128]{1,0:T(1,128)}', space=vmem, size = 0x12000, scoped, tag = 'internal scratch']
  %s0 = inlined_call_operand.hbm [shape: f32[16,128], index: 0, kind: input, shape index: {}]
  %s1 = inlined_call_operand.hbm [shape: f32[16,128], index: 1, kind: input, shape index: {}]
  %s2 = inlined_call_operand.hbm [shape: f32[1,8,128], index: 2, kind: output, shape index: {}]
  %s3 = sld [smem:[#allocation0]]
  $region30: #{tpu_custom_call.1} parent=0
    _
  %s5 = ssub.s32 1, %s3
  %s6 = scalar_select 0, %s5, %s3
  $region1: #{tpu_custom_call.1} parent=0
    #allocation2 [shape = 'u8[8192]{0}', space=vmem, size = 0x2000, scoped, tag = 'input window, operand 0, single buffered']
    #allocation3 [shape = 's32[1]{0}', space=sflag, size = 0x4, scoped, tag = 'scoped memory for tpu_custom_call.1']
    #allocation4 [shape = 's32[1]{0}', space=sflag, size = 0x4, scoped, tag = 'scoped memory for tpu_custom_call.1']
    #allocation5 [shape = 'u8[8192]{0}', space=vmem, size = 0x2000, scoped, tag = 'input window, operand 1, single buffered']
    #allocation6 [shape = 's32[1]{0}', space=sflag, size = 0x4, scoped, tag = 'scoped memory for tpu_custom_call.1']
    #allocation7 [shape = 'u8[4096]{0}', space=vmem, size = 0x1000, scoped, tag = 'output window, operand 0, single buffered']
    %7 = vsyncpa [#allocation3], 0
    %8 = vsyncpa [#allocation6], 0
    %9 = vsyncpa [#allocation4], 0
    // Predicated region
    $region2: #{tpu_custom_call.1} parent=1 // pred_check
      _
    $region3: #{tpu_custom_call.1} parent=1 // pred_check_branch
      %11 = sbr.rel (0) target = $region5
    $region4: #{tpu_custom_call.1} parent=1 // pred_region
      %s12 = sadd.s32 0, 0
      %s13 = smul.u32 2, %s12
      %s15 = ssub.s32 256, 256
      %16 = vsyncadd [#allocation3], %s15
      %s17 = smul.addr %s13, 128
      %s18 = scalar_lea.hbm %s0, %s17
      %s19 = sshll.u32 [#allocation2], 4
      %s20 = int_to_ptr.vmem [resolvable:$true] %s19
      %25 = dma.hbm_to_vmem [thread:$0]  %s18, 256, %s20, [#allocation3], 128, 128, 8
    $region5: #{tpu_custom_call.1} parent=1 // pred_fallthru
      _
    // Predicated region
    $region6: #{tpu_custom_call.1} parent=1 // pred_check
      _
    $region7: #{tpu_custom_call.1} parent=1 // pred_check_branch
      %27 = sbr.rel (0) target = $region9
    $region8: #{tpu_custom_call.1} parent=1 // pred_region
      %s28 = sadd.s32 0, 0
      %s29 = smul.u32 2, %s28
      %s31 = ssub.s32 256, 256
      %32 = vsyncadd [#allocation6], %s31
      %s33 = smul.addr %s29, 128
      %s34 = scalar_lea.hbm %s1, %s33
      %s35 = sshll.u32 [#allocation5], 4
      %s36 = int_to_ptr.vmem [resolvable:$true] %s35
      %41 = dma.hbm_to_vmem [thread:$0]  %s34, 256, %s36, [#allocation6], 128, 128, 8
    $region9: #{tpu_custom_call.1} parent=1 // pred_fallthru
      _
    // Predicated region
    $region10: #{tpu_custom_call.1} parent=1 // pred_check
      _
    $region11: #{tpu_custom_call.1} parent=1 // pred_check_branch
      %43 = sbr.rel (0) target = $region13
    $region12: #{tpu_custom_call.1} parent=1 // pred_region
      %44 = dma.done [#allocation3], 256
    $region13: #{tpu_custom_call.1} parent=1 // pred_fallthru
      _
    // Predicated region
    $region14: #{tpu_custom_call.1} parent=1 // pred_check
      _
    $region15: #{tpu_custom_call.1} parent=1 // pred_check_branch
      %46 = sbr.rel (0) target = $region17
    $region16: #{tpu_custom_call.1} parent=1 // pred_region
      %47 = dma.done [#allocation6], 256
    $region17: #{tpu_custom_call.1} parent=1 // pred_fallthru
      _
    %s48 = sadd.s32 0, 0
    %s49 = smul.u32 2, %s48
    %s50 = sadd.s32 0, 0
    %s51 = smul.u32 2, %s50
    %p52 = scmp.eq.s32.totalorder 0, 0
    // Predicated region
    $region18: #{tpu_custom_call.1} parent=1 // pred_check
      %p53 = pneg %p52
    $region19: #{tpu_custom_call.1} parent=1 // pred_check_branch
      %55 = sbr.rel (%p53) target = $region21
    $region20: #{tpu_custom_call.1} parent=1 // pred_region
      %56 = vst [vmem:[#allocation7] sm:$0xff] 0.0
    $region21: #{tpu_custom_call.1} parent=1 // pred_fallthru
      _
    %v57 = vld [vmem:[#allocation2] sm:$0xff]
    %v58 = vld [vmem:[#allocation2 + $0x8] sm:$0xff]
    %v59 = vld [vmem:[#allocation5] sm:$0xff]
    %v60 = vld [vmem:[#allocation5 + $0x8] sm:$0xff]
    %v61 = vsub.f32 %v57, %v59
    %v62 = vsub.f32 %v58, %v60
    %v63 = vmul.f32 %v61, %v61
    %v64 = vmul.f32 %v62, %v62
    %v65 = vld [vmem:[#allocation7] sm:$0xff]
    %v66 = vadd.f32 %v63, %v64
    %v67 = vadd.f32 %v65, %v66
    %68 = vst [vmem:[#allocation7] sm:$0xff] %v67
    // Predicated region
    $region22: #{tpu_custom_call.1} parent=1 // pred_check
      _
    $region23: #{tpu_custom_call.1} parent=1 // pred_check_branch
      %70 = sbr.rel (0) target = $region25
    $region24: #{tpu_custom_call.1} parent=1 // pred_region
      %s72 = ssub.s32 128, 128
      %73 = vsyncadd [#allocation4], %s72
      %s75 = sshll.u32 [#allocation7], 4
      %s76 = int_to_ptr.vmem [resolvable:$true] %s75
      %78 = dma.vmem_to_hbm [thread:$0]  %s76, 128, %s2, [#allocation4]
    $region25: #{tpu_custom_call.1} parent=1 // pred_fallthru
      _
    // Predicated region
    $region26: #{tpu_custom_call.1} parent=1 // pred_check
      _
    $region27: #{tpu_custom_call.1} parent=1 // pred_check_branch
      %80 = sbr.rel (0) target = $region29
    $region28: #{tpu_custom_call.1} parent=1 // pred_region
      %81 = dma.done [#allocation4], 128
    $region29: #{tpu_custom_call.1} parent=1 // pred_fallthru
      _
    %82 = vsyncpa [#allocation3], 1
    %83 = vsyncpa [#allocation6], 1
    %84 = vsyncpa [#allocation4], 1

</llo_original>
